<compile_context>
chip_gen: v5e
topology: v5e:2x2
jax: 0.10.0
libtpu: 0.0.40
codegen_flags: <defaults>
</compile_context>

<pallas_src>
import jax
import jax.numpy as jnp
from jax import lax
from jax.experimental import pallas as pl
from jax.experimental.pallas import tpu as pltpu


def policy_slm_kernel(x_ref, w1_ref, b1_ref, w2_ref, b2_ref, o_ref):
    # Cast matmul operands to bf16 in VMEM (no extra HBM pass); accumulate f32.
    x_bf = x_ref[...].astype(jnp.bfloat16)        # (tile_b, D)
    w1_bf = w1_ref[...].astype(jnp.bfloat16)      # (H, D)
    # fc1, transposed: contract on D  ->  hT = W1 @ x^T : (H, tile_b) on the MXU.
    hT = lax.dot_general(
        w1_bf, x_bf,
        dimension_numbers=(((1,), (1,)), ((), ())),
        preferred_element_type=jnp.float32)
    hT = jnp.maximum(hT + b1_ref[...], 0.0)       # bias + ReLU, f32 on the VPU
    # fc2: (H, tile_b) * (H, 1) -> sum over H (XLU sublane reduce) -> (1, tile_b).
    y = jnp.sum(hT * w2_ref[...], axis=0, keepdims=True)
    o_ref[...] = (y + b2_ref[0, 0]).astype(o_ref.dtype)


def _pick_tile_b(B, D, H):
    """Largest lane-aligned divisor of B whose working set fits a conservative
    VMEM budget, with >=2 grid steps for large batches (v7x megacore)."""
    # Per-row working set: triple-buffered f32 x tile + bf16 copy + f32 hT + slack.
    bytes_per_row = D * 4 * 3 + D * 2 + H * 4 + H * 2 + 16
    budget = 16 << 20                  # fits v5e/v6e/v7x scoped-VMEM limits easily
    cap = max(128, budget // bytes_per_row)
    cap = min(cap, B)
    if B >= 1024:
        cap = min(cap, B // 2)         # >=2 parallel grid steps (v7x has 2 TCs)
    for align in (512, 256, 128):      # prefer 256-multiples for v6e/v7x MXU
        if B % align == 0:
            t = (cap // align) * align
            while t >= align:
                if B % t == 0:
                    return t
                t -= align
    # Small / ragged batches: single whole-batch tile (demo path).
    # TODO(synk): pad B to a lane multiple instead of a whole-batch tile for
    # very large batches that are not 128-divisible.
    return B


def _x_block_spec(tile_b, D, n_steps):
    index_map = lambda i: (i, 0)
    if n_steps >= 3 and hasattr(pl, "Buffered"):
        try:  # deeper input buffering hides DMA latency; cheap for small D
            return pl.BlockSpec((tile_b, D), index_map,
                                pipeline_mode=pl.Buffered(3))
        except TypeError:
            pass
    return pl.BlockSpec((tile_b, D), index_map)


def policy_slm_forward(x, w1, b1, w2, b2, *, tile_b=None):
    """PolicySLM forward: fc2(relu(fc1(x))).

    Args (PyTorch nn.Linear layout):
      x:  (B, D) f32, w1: (H, D) f32, b1: (H,) f32, w2: (1, H) f32, b2: (1,) f32
    Returns: (B, 1) f32.
    """
    B, D = x.shape
    H = w1.shape[0]

    if tile_b is None:
        tile_b = _pick_tile_b(B, D, H)
    assert B % tile_b == 0, "batch must be divisible by tile_b"
    n_steps = B // tile_b

    xc = x.astype(jnp.float32)                      # native layout: no HBM transpose/cast
    w1c = w1.astype(jnp.float32)                    # f32 in HBM; bf16 cast happens in-kernel
    b1c = b1.reshape(H, 1).astype(jnp.float32)
    w2c = w2.reshape(H, 1).astype(jnp.float32)      # fc2 weight column
    b2c = b2.reshape(1, 1).astype(jnp.float32)      # SMEM scalar

    flops = 2 * B * D * H + 4 * B * H + B
    bytes_accessed = (B * D + H * D + 2 * H + 1 + B) * 4

    yT = pl.pallas_call(
        policy_slm_kernel,
        out_shape=jax.ShapeDtypeStruct((1, B), jnp.float32),
        grid_spec=pltpu.PrefetchScalarGridSpec(
            num_scalar_prefetch=0,
            grid=(n_steps,),
            in_specs=[
                _x_block_spec(tile_b, D, n_steps),                  # x tile (batch rows)
                pl.BlockSpec((H, D), lambda i: (0, 0)),             # W1 (grid-invariant)
                pl.BlockSpec((H, 1), lambda i: (0, 0)),             # b1 column
                pl.BlockSpec((H, 1), lambda i: (0, 0)),             # w2 column
                pl.BlockSpec(memory_space=pltpu.MemorySpace.SMEM),  # b2 scalar in SMEM
            ],
            out_specs=pl.BlockSpec((1, tile_b), lambda i: (0, i)),  # lane-dense y^T
        ),
        compiler_params=pltpu.CompilerParams(
            dimension_semantics=("parallel",),
            vmem_limit_bytes=32 << 20,
        ),
        cost_estimate=pl.CostEstimate(
            flops=flops, transcendentals=0, bytes_accessed=bytes_accessed),
    )(xc, w1c, b1c, w2c, b2c)

    return yT.reshape(B, 1)          # (1, B) -> (B, 1): no-copy layout change


def reference_forward(x, w1, b1, w2, b2):
    # Pure-JAX reference with PyTorch nn.Linear semantics.
    h = jnp.maximum(x @ w1.T + b1, 0.0)
    return h @ w2.T + b2


if __name__ == "__main__":
    # Small shapes consistent with the module: batch=8, input_dim=16, hidden_dim=32.
    B, D, H = 8, 16, 32

    key = jax.random.PRNGKey(0)
    kx, kw1, kb1, kw2, kb2 = jax.random.split(key, 5)

    x = jax.random.normal(kx, (B, D), dtype=jnp.float32)

    # Deterministic synthetic parameter init (PyTorch-style uniform bounds).
    bound1 = 1.0 / (D ** 0.5)
    bound2 = 1.0 / (H ** 0.5)
    w1 = jax.random.uniform(kw1, (H, D), minval=-bound1, maxval=bound1, dtype=jnp.float32)
    b1 = jax.random.uniform(kb1, (H,), minval=-bound1, maxval=bound1, dtype=jnp.float32)
    w2 = jax.random.uniform(kw2, (1, H), minval=-bound2, maxval=bound2, dtype=jnp.float32)
    b2 = jax.random.uniform(kb2, (1,), minval=-bound2, maxval=bound2, dtype=jnp.float32)

    out = jax.block_until_ready(policy_slm_forward(x, w1, b1, w2, b2))
    assert out.shape == (B, 1)

    # bf16-aware reference (kernel casts the fc1 operands to bf16 on-chip).
    xq = x.astype(jnp.bfloat16).astype(jnp.float32)
    w1q = w1.astype(jnp.bfloat16).astype(jnp.float32)
    ref_bf16 = reference_forward(xq, w1q, b1, w2, b2)
    assert jnp.allclose(out, ref_bf16, atol=1e-3, rtol=1e-3), "mismatch vs bf16-aware reference"

    # Loose sanity check against the full-f32 reference (bf16 rounding only).
    ref_f32 = reference_forward(x, w1, b1, w2, b2)
    assert jnp.allclose(out, ref_f32, atol=5e-2, rtol=5e-2), "mismatch vs f32 reference"

    print("KERNEL_OK")
</pallas_src>

<mosaic_0001>
module attributes {stable_mosaic.version = 11 : i64} {
  func.func @policy_slm_kernel(%arg0: i32, %arg1: memref<8x16xf32, #tpu.memory_space<vmem>>, %arg2: memref<32x16xf32, #tpu.memory_space<vmem>>, %arg3: memref<32x1xf32, #tpu.memory_space<vmem>>, %arg4: memref<32x1xf32, #tpu.memory_space<vmem>>, %arg5: memref<1x1xf32, #tpu.memory_space<smem>>, %arg6: memref<1x8xf32, #tpu.memory_space<vmem>>) attributes {dimension_semantics = [#tpu.dimension_semantics<parallel>], iteration_bounds = array<i64: 1>, scalar_prefetch = 0 : i64, scratch_operands = 0 : i64, tpu.core_type = #tpu.core_type<tc>, window_params = [{transform_indices = @transform_0, window_bounds = array<i64: 8, 16>}, {pipeline_mode = #tpu.pipeline_mode<synchronous>, transform_indices = @transform_1, window_bounds = array<i64: 32, 16>}, {pipeline_mode = #tpu.pipeline_mode<synchronous>, transform_indices = @transform_2, window_bounds = array<i64: 32, 1>}, {pipeline_mode = #tpu.pipeline_mode<synchronous>, transform_indices = @transform_3, window_bounds = array<i64: 32, 1>}, {transform_indices = @transform_4, window_bounds = array<i64: 1, 1>}, {transform_indices = @transform_5, window_bounds = array<i64: 1, 8>}]} {
    %c0 = arith.constant 0 : index
    %c0_0 = arith.constant 0 : index
    %0 = vector.load %arg1[%c0, %c0_0] : memref<8x16xf32, #tpu.memory_space<vmem>>, vector<8x16xf32>
    %1 = arith.truncf %0 : vector<8x16xf32> to vector<8x16xbf16>
    %c0_1 = arith.constant 0 : index
    %c0_2 = arith.constant 0 : index
    %2 = vector.load %arg2[%c0_1, %c0_2] : memref<32x16xf32, #tpu.memory_space<vmem>>, vector<32x16xf32>
    %3 = arith.truncf %2 : vector<32x16xf32> to vector<32x16xbf16>
    %cst = arith.constant dense<0.000000e+00> : vector<32x8xf32>
    %4 = tpu.matmul %3, %1, %cst {dimension_numbers = #tpu.dot_dimension_numbers<[1], [1], [0], [0], [0, 0, 1, 0], [], []>} : vector<32x16xbf16>, vector<8x16xbf16>, vector<32x8xf32> -> vector<32x8xf32>
    %c0_3 = arith.constant 0 : index
    %c0_4 = arith.constant 0 : index
    %5 = vector.load %arg3[%c0_3, %c0_4] : memref<32x1xf32, #tpu.memory_space<vmem>>, vector<32x1xf32>
    %6 = vector.broadcast %5 : vector<32x1xf32> to vector<32x8xf32>
    %7 = arith.addf %4, %6 : vector<32x8xf32>
    %cst_5 = arith.constant 0.000000e+00 : f32
    %8 = vector.broadcast %cst_5 : f32 to vector<32x8xf32>
    %9 = arith.maximumf %7, %8 : vector<32x8xf32>
    %c0_6 = arith.constant 0 : index
    %c0_7 = arith.constant 0 : index
    %10 = vector.load %arg4[%c0_6, %c0_7] : memref<32x1xf32, #tpu.memory_space<vmem>>, vector<32x1xf32>
    %11 = vector.broadcast %10 : vector<32x1xf32> to vector<32x8xf32>
    %12 = arith.mulf %9, %11 : vector<32x8xf32>
    %cst_8 = arith.constant dense<0.000000e+00> : vector<8xf32>
    %13 = vector.multi_reduction <add>, %12, %cst_8 [0] : vector<32x8xf32> to vector<8xf32>
    %14 = vector.shape_cast %13 : vector<8xf32> to vector<1x8xf32>
    %c0_9 = arith.constant 0 : index
    %c0_10 = arith.constant 0 : index
    %15 = memref.load %arg5[%c0_9, %c0_10] : memref<1x1xf32, #tpu.memory_space<smem>>
    %16 = vector.broadcast %15 : f32 to vector<1x8xf32>
    %17 = arith.addf %14, %16 : vector<1x8xf32>
    %c0_11 = arith.constant 0 : index
    %c0_12 = arith.constant 0 : index
    %18 = vector.load %arg6[%c0_11, %c0_12] : memref<1x8xf32, #tpu.memory_space<vmem>>, vector<1x8xf32>
    tpu.vector_store %arg6[%c0_11, %c0_12], %17 {strides = array<i32>} : memref<1x8xf32, #tpu.memory_space<vmem>>, vector<1x8xf32>,
    return
  }
  func.func @transform_0(%arg0: i32) -> (i32, i32) {
    %c0_i32 = arith.constant 0 : i32
    %c0_i32_0 = arith.constant 0 : i32
    return %arg0, %c0_i32 : i32, i32
  }
  func.func @transform_1(%arg0: i32) -> (i32, i32) {
    %c0_i32 = arith.constant 0 : i32
    %c0_i32_0 = arith.constant 0 : i32
    %c0_i32_1 = arith.constant 0 : i32
    return %c0_i32, %c0_i32_0 : i32, i32
  }
  func.func @transform_2(%arg0: i32) -> (i32, i32) {
    %c0_i32 = arith.constant 0 : i32
    %c0_i32_0 = arith.constant 0 : i32
    %c0_i32_1 = arith.constant 0 : i32
    return %c0_i32, %c0_i32_0 : i32, i32
  }
  func.func @transform_3(%arg0: i32) -> (i32, i32) {
    %c0_i32 = arith.constant 0 : i32
    %c0_i32_0 = arith.constant 0 : i32
    %c0_i32_1 = arith.constant 0 : i32
    return %c0_i32, %c0_i32_0 : i32, i32
  }
  func.func @transform_4(%arg0: i32) -> (i32, i32) {
    %c0_i32 = arith.constant 0 : i32
    %c0_i32_0 = arith.constant 0 : i32
    %c0_i32_1 = arith.constant 0 : i32
    return %c0_i32, %c0_i32_0 : i32, i32
  }
  func.func @transform_5(%arg0: i32) -> (i32, i32) {
    %c0_i32 = arith.constant 0 : i32
    %c0_i32_0 = arith.constant 0 : i32
    return %c0_i32, %arg0 : i32, i32
  }
}

</mosaic_0001>

<llo_original>
// kernel: tpu_custom_call.1
$region0: #{tpu_custom_call.1}
  #allocation0 [shape = 'u32[]', space=smem, size = 0x4, offset = 0x4, fixed_abs, tag = 'smem constant byte address 0x4 - core index']
  #allocation1 [shape = 'u32[72,128]{1,0:T(1,128)}', space=vmem, size = 0x9000, scoped, tag = 'internal scratch']
  #allocation2 [shape = 'f32[1,1]{1,0:T(1,128)S(6)}', space=smem, size = 0x200, scoped, tag = 'scoped memory for tpu_custom_call.1']
  %s0 = inlined_call_operand.vmem [shape: f32[8,16], index: 0, kind: input, shape index: {}]
  %s1 = inlined_call_operand.vmem [shape: f32[32,16], index: 1, kind: input, shape index: {}]
  %s2 = inlined_call_operand.vmem [shape: f32[32,1], index: 2, kind: input, shape index: {}]
  %s3 = inlined_call_operand.vmem [shape: f32[32,1], index: 3, kind: input, shape index: {}]
  %s4 = inlined_call_operand.<no memory space> [shape: f32[1,1], index: 4, kind: input, shape index: {}]
  %s5 = inlined_call_operand.hbm [shape: f32[1,8], index: 5, kind: output, shape index: {}]
  %s6 = sld [smem:[#allocation0]]
  $region30: #{tpu_custom_call.1} parent=0
    _
  %s8 = ssub.s32 1, %s6
  %s9 = scalar_select 0, %s8, %s6
  %10 = sst [smem:[#allocation2]] %s4
  $region1: #{tpu_custom_call.1} parent=0
    #allocation3 [shape = 'u8[512]{0}', space=vmem, size = 0x400, scoped, tag = 'output window, operand 0, single buffered']
    #allocation4 [shape = 's32[1]{0}', space=sflag, size = 0x4, scoped, tag = 'scoped memory for tpu_custom_call.1']
    %11 = vsyncpa [#allocation4], 0
    // Predicated region
    $region2: #{tpu_custom_call.1} parent=1 // pred_check
      _
    $region3: #{tpu_custom_call.1} parent=1 // pred_check_branch
      %13 = sbr.rel (0) target = $region5
    $region4: #{tpu_custom_call.1} parent=1 // pred_region
      _
    $region5: #{tpu_custom_call.1} parent=1 // pred_fallthru
      _
    // Predicated region
    $region6: #{tpu_custom_call.1} parent=1 // pred_check
      _
    $region7: #{tpu_custom_call.1} parent=1 // pred_check_branch
      %15 = sbr.rel (0) target = $region9
    $region8: #{tpu_custom_call.1} parent=1 // pred_region
      _
    $region9: #{tpu_custom_call.1} parent=1 // pred_fallthru
      _
    // Predicated region
    $region10: #{tpu_custom_call.1} parent=1 // pred_check
      _
    $region11: #{tpu_custom_call.1} parent=1 // pred_check_branch
      %17 = sbr.rel (0) target = $region13
    $region12: #{tpu_custom_call.1} parent=1 // pred_region
      _
    $region13: #{tpu_custom_call.1} parent=1 // pred_fallthru
      _
    // Predicated region
    $region14: #{tpu_custom_call.1} parent=1 // pred_check
      _
    $region15: #{tpu_custom_call.1} parent=1 // pred_check_branch
      %19 = sbr.rel (0) target = $region17
    $region16: #{tpu_custom_call.1} parent=1 // pred_region
      _
    $region17: #{tpu_custom_call.1} parent=1 // pred_fallthru
      _
    // Predicated region
    $region18: #{tpu_custom_call.1} parent=1 // pred_check
      _
    $region19: #{tpu_custom_call.1} parent=1 // pred_check_branch
      %21 = sbr.rel (0) target = $region21
    $region20: #{tpu_custom_call.1} parent=1 // pred_region
      _
    $region21: #{tpu_custom_call.1} parent=1 // pred_fallthru
      _
    %v23 = vld [vmem:[%s0] sm:$0xff]
    %v24 = vpack.c.bf16 %v23, %v23
    %v25 = vld [vmem:[%s1] sm:$0xff]
    %v26 = vld [vmem:[%s1 + $0x8] sm:$0xff]
    %v27 = vld [vmem:[%s1 + $0x10] sm:$0xff]
    %v28 = vld [vmem:[%s1 + $0x18] sm:$0xff]
    %v29 = vpack.c.bf16 %v26, %v25
    %v30 = vpack.c.bf16 %v28, %v27
    %v31 = vld [vmem:[%s2] sm:$0xff]
    %v32 = vld [vmem:[%s2 + $0x8] sm:$0xff]
    %v33 = vld [vmem:[%s2 + $0x10] sm:$0xff]
    %v34 = vld [vmem:[%s2 + $0x18] sm:$0xff]
    %36 = vset.pattern.permute.xlu0 0
    %37 = vperm.xlu0 %36, %v31
    %v38 = vpop.permute.xlu0 %37
    %41 = vset.pattern.permute.xlu0 0
    %42 = vperm.xlu0 %41, %v32
    %v43 = vpop.permute.xlu0 %42
    %46 = vset.pattern.permute.xlu0 0
    %47 = vperm.xlu0 %46, %v33
    %v48 = vpop.permute.xlu0 %47
    %51 = vset.pattern.permute.xlu0 0
    %52 = vperm.xlu0 %51, %v34
    %v53 = vpop.permute.xlu0 %52
    %vm55 = vcmask 130048
    %v57 = vsel %vm55, %v29, 0
    %v60 = vsel %vm55, %v30, 0
    %v63 = vsel %vm55, %v24, 0
    %65 = vmatpush.bf16.xpose.msra.mxu0 0
    %66 = vmatpush.bf16.xpose.msra.mxu0 0
    %67 = vmatpush.bf16.xpose.msra.mxu0 0
    %68 = vmatpush.bf16.xpose.msra.mxu0 0
    %69 = vmatpush.bf16.xpose.msra.mxu0 0
    %70 = vmatpush.bf16.xpose.msra.mxu0 0
    %71 = vmatpush.bf16.xpose.msra.mxu0 0
    %72 = vmatpush.bf16.xpose.msra.mxu0 %v63
    %73 = vmatmul.bf16.gmra.mxu0 %v57
    %v74 = vpop.f32.mrf.mxu0
    %v75 = vadd.f32 %v38, %v74
    %v76 = vpop.f32.mrf.mxu0
    %v77 = vadd.f32 %v43, %v76
    %78 = vmatmul.bf16.gmra.mxu0 %v60
    %v79 = vpop.f32.mrf.mxu0
    %v80 = vadd.f32 %v48, %v79
    %v81 = vpop.f32.mrf.mxu0
    %v82 = vadd.f32 %v53, %v81
    %83 = vdwg.mxu0
    %v84 = vmax.f32 %v75, 0.0
    %v85 = vmax.f32 %v77, 0.0
    %v86 = vmax.f32 %v80, 0.0
    %v87 = vmax.f32 %v82, 0.0
    %v88 = vld [vmem:[%s3] sm:$0xff]
    %v89 = vld [vmem:[%s3 + $0x8] sm:$0xff]
    %v90 = vld [vmem:[%s3 + $0x10] sm:$0xff]
    %v91 = vld [vmem:[%s3 + $0x18] sm:$0xff]
    %93 = vset.pattern.permute.xlu0 0
    %94 = vperm.xlu0 %93, %v88
    %v95 = vpop.permute.xlu0 %94
    %98 = vset.pattern.permute.xlu0 0
    %99 = vperm.xlu0 %98, %v89
    %v100 = vpop.permute.xlu0 %99
    %103 = vset.pattern.permute.xlu0 0
    %104 = vperm.xlu0 %103, %v90
    %v105 = vpop.permute.xlu0 %104
    %108 = vset.pattern.permute.xlu0 0
    %109 = vperm.xlu0 %108, %v91
    %v110 = vpop.permute.xlu0 %109
    %v112 = vmul.f32 %v84, %v95
    %v113 = vmul.f32 %v85, %v100
    %v114 = vmul.f32 %v86, %v105
    %v115 = vmul.f32 %v87, %v110
    %vm116 = vcmask 64512
    %v117 = vsel %vm116, %v112, 0.0
    %v118 = vsel %vm116, %v113, 0.0
    %v119 = vadd.f32 %v117, %v118
    %v120 = vsel %vm116, %v114, 0.0
    %v121 = vadd.f32 %v119, %v120
    %v122 = vsel %vm116, %v115, 0.0
    %v123 = vadd.f32 %v121, %v122
    %v124 = vrot.slane %v123, 4
    %v125 = vadd.f32 %v123, %v124
    %v126 = vrot.slane %v125, 2
    %v127 = vadd.f32 %v125, %v126
    %v128 = vrot.slane %v127, 1
    %v129 = vadd.f32 %v127, %v128
    %s130 = sld [smem:[#allocation2]]
    %v131 = vstv %s130
    %v132 = vadd.f32 %v129, %v131
    %vm133 = vcmask 57344
    %134 = vst.msk [vmem:[#allocation3] sm:$0x1] %vm133, %v132
    // Predicated region
    $region22: #{tpu_custom_call.1} parent=1 // pred_check
      _
    $region23: #{tpu_custom_call.1} parent=1 // pred_check_branch
      %136 = sbr.rel (0) target = $region25
    $region24: #{tpu_custom_call.1} parent=1 // pred_region
      %138 = vsyncadd [#allocation4], 0
      %s140 = sshll.u32 [#allocation3], 4
      %s141 = int_to_ptr.vmem [resolvable:$true] %s140
      %s142 = sshll.u32 %s5, 4
      %s143 = int_to_ptr.hbm [resolvable:$true] %s142
      %145 = dma.vmem_to_hbm [thread:$0]  %s141, 16, %s143, [#allocation4]
    $region25: #{tpu_custom_call.1} parent=1 // pred_fallthru
      _
    // Predicated region
    $region26: #{tpu_custom_call.1} parent=1 // pred_check
      _
    $region27: #{tpu_custom_call.1} parent=1 // pred_check_branch
      %147 = sbr.rel (0) target = $region29
    $region28: #{tpu_custom_call.1} parent=1 // pred_region
      %149 = dma.done [#allocation4], 16
    $region29: #{tpu_custom_call.1} parent=1 // pred_fallthru
      _
    %150 = vsyncpa [#allocation4], 1

</llo_original>
